<compile_context>
chip_gen: v7x
topology: tpu7x:2x2x1
jax: 0.10.0
libtpu: 0.0.40
codegen_flags: <defaults>
</compile_context>

<pallas_src>
import jax
import jax.numpy as jnp
import numpy as np
from jax.experimental import pallas as pl
from jax.experimental.pallas import tpu as pltpu


def _round_up(v, m):
    return ((v + m - 1) // m) * m


def _make_kernel(n_pad, m_out):
    """Kernel factory. n_pad = padded hidden width, m_out = padded logit rows."""

    def kernel(x_ref,
               w1_ref, b1_ref,
               w24a_ref, b2_ref,
               w34b_ref, b3_ref,
               w4c_ref, b4_ref,
               mc_ref, vc_ref,
               o_ref):
        f32 = jnp.float32
        bf16 = jnp.bfloat16
        n = n_pad

        # Feature-major layout: activations are (feat, TB), batch on lanes.
        x = x_ref[...]                                            # (1, TB) f32

        # lin1_1 with inDim == 1 is an outer product -> VPU broadcast (f32).
        x1 = jnp.maximum(w1_ref[...] * x + b1_ref[...], 0.0)      # (n, TB)

        # Stacked dot #1 (one weight latch):
        #   rows 0:n        -> W2  @ x1   (pre-ReLU x2)
        #   rows n:n+m_out  -> W4a @ x1   (logits term a; pad rows are 0)
        y = jnp.dot(w24a_ref[...], x1.astype(bf16),
                    preferred_element_type=f32)                   # (n+m_out, TB)
        x2 = jnp.maximum(y[0:n, :] + b2_ref[...], 0.0)            # (n, TB) f32
        la = y[n:n + m_out, :]                                    # (m_out, TB)

        # Stacked dot #2: W3 @ x2 and W4b @ x2 share one latch.
        z = jnp.dot(w34b_ref[...], x2.astype(bf16),
                    preferred_element_type=f32)                   # (n+m_out, TB)
        x3 = jnp.maximum(z[0:n, :] + b3_ref[...], 0.0)
        lb = z[n:n + m_out, :]

        # Remaining logits term.
        lc = jnp.dot(w4c_ref[...], x3.astype(bf16),
                     preferred_element_type=f32)                  # (m_out, TB)

        # b4 pad rows hold -1e30 so the padded softmax rows contribute
        # exactly 0 after exp.
        logits = la + lb + lc + b4_ref[...]                       # (m_out, TB) f32

        # Softmax over the feature axis (f32; EUP exp, XLU sublane reduces,
        # EUP approx reciprocal folded into the mixture).
        m = jnp.max(logits, axis=0, keepdims=True)                # (1, TB)
        p = jnp.exp(logits - m)                                   # (m_out, TB)
        inv = pl.reciprocal(jnp.sum(p, axis=0, keepdims=True), approx=True)

        # Fixed-Gaussian mixture on the VPU/XLU in f32 (K is tiny; avoids an
        # extra MXU latch and a bf16 cast of p).
        mean_row = jnp.sum(p * mc_ref[...], axis=0, keepdims=True) * inv
        var_row = jnp.sum(p * vc_ref[...], axis=0, keepdims=True) * inv

        # Two row-slice stores; exp only on the variance row.
        o_ref[0:1, :] = mean_row
        o_ref[1:2, :] = jnp.exp(var_row)

    return kernel


def _pack_params(params):
    """Pad to sublane multiples, stack W2/W4a and W3/W4b, pre-cast MXU weights."""
    n_lat = params["w2"].shape[0]
    out_dim = params["w4"].shape[0]
    n_pad = _round_up(n_lat, 8)
    m_out = _round_up(out_dim, 8)

    def pad_to(a, rows, cols):
        out = jnp.zeros((rows, cols), jnp.float32)
        return out.at[:a.shape[0], :a.shape[1]].set(a.astype(jnp.float32))

    w1p = pad_to(params["w1"], n_pad, 1)
    b1p = pad_to(params["b1"], n_pad, 1)
    b2p = pad_to(params["b2"], n_pad, 1)
    b3p = pad_to(params["b3"], n_pad, 1)

    w2p = pad_to(params["w2"], n_pad, n_pad)
    w3p = pad_to(params["w3"], n_pad, n_pad)
    w4 = params["w4"]
    w4a = pad_to(w4[:, :n_lat], m_out, n_pad)
    w4b = pad_to(w4[:, n_lat:2 * n_lat], m_out, n_pad)
    w4c = pad_to(w4[:, 2 * n_lat:], m_out, n_pad)

    # bf16 MXU operands (accumulation stays f32 in-kernel).
    w24a = jnp.concatenate([w2p, w4a], axis=0).astype(jnp.bfloat16)   # (n+m, n)
    w34b = jnp.concatenate([w3p, w4b], axis=0).astype(jnp.bfloat16)   # (n+m, n)
    w4c8 = w4c.astype(jnp.bfloat16)                                   # (m, n)

    b48 = jnp.full((m_out, 1), -1e30, jnp.float32)
    b48 = b48.at[:out_dim, :].set(params["b4"].astype(jnp.float32))

    s = params["scalings"]
    mc = pad_to(s[0, 0] * params["means"], m_out, 1)                  # (m, 1)
    vc = pad_to(s[0, 1] * params["variances"], m_out, 1)              # (m, 1)

    weights = (w1p, b1p, w24a, b2p, w34b, b3p, w4c8, b48, mc, vc)
    return weights, n_pad, m_out


def net_transformer_fixed_gauss(x, params, *, tile_b=None):
    # TODO(synk): the N_latent2 != -1 (two-transformer) branch is structurally
    # identical; only the default single-transformer path is implemented here.
    B, in_dim = x.shape
    assert in_dim == 1, "kernel specialised for inDim == 1 (default config)"

    weights, n_pad, m_out = _pack_params(params)

    if tile_b is None:
        # Big lane-dense tile to amortize the ~0.35us/step pipeline cost,
        # capped so the "parallel" axis has >= 2 grid steps when the batch is
        # large enough (keeps the second v7x TensorCore busy) and the per-tile
        # VMEM footprint (~13 MiB at 16384) fits the default scoped limit.
        tile_b = min(16384, _round_up(B, 128))
        if B > 2 * 128:
            tile_b = min(tile_b, max(128, (B // 2 // 128) * 128))
    Bp = _round_up(B, tile_b)

    # inDim == 1: (B, 1) -> (1, B) is a pure reshape (no transpose pass).
    xt = x.astype(jnp.float32).reshape(1, B)
    if Bp != B:
        xt = jnp.pad(xt, ((0, 0), (0, Bp - B)))

    def resident(a):
        # Full-array block, same index every grid step -> stays in VMEM.
        return pl.BlockSpec(a.shape, lambda i: (0, 0))

    grid = (Bp // tile_b,)
    flops_per_row = 2 * (n_pad
                         + 2 * (n_pad + m_out) * n_pad
                         + m_out * n_pad
                         + 4 * m_out)
    weight_bytes = sum(int(np.prod(a.shape)) * a.dtype.itemsize for a in weights)

    out_t = pl.pallas_call(
        _make_kernel(n_pad, m_out),
        out_shape=jax.ShapeDtypeStruct((2, Bp), jnp.float32),
        grid=grid,
        in_specs=[pl.BlockSpec((1, tile_b), lambda i: (0, i))]
                 + [resident(a) for a in weights],
        out_specs=pl.BlockSpec((2, tile_b), lambda i: (0, i)),
        compiler_params=pltpu.CompilerParams(
            dimension_semantics=("parallel",)),
        cost_estimate=pl.CostEstimate(
            flops=int(Bp * flops_per_row),
            transcendentals=int(Bp * (m_out + 2)),
            bytes_accessed=int(Bp * 12 + weight_bytes)),
    )(xt, *weights)

    # NOTE: callers able to consume the lane-dense (2, B) layout should do so;
    # this final transpose is a separate XLA HBM pass.
    return out_t[:, :B].T                                              # (B, 2)


def make_params(key, in_dim=1, out_dim=4, n_latent1=20):
    ks = jax.random.split(key, 9)

    def lin(kw, kb, fan_in, fan_out):
        # Deterministic synthetic init (PyTorch-like uniform range).
        bound = 1.0 / np.sqrt(fan_in)
        w = jax.random.uniform(kw, (fan_out, fan_in), jnp.float32, -bound, bound)
        b = jax.random.uniform(kb, (fan_out, 1), jnp.float32, -bound, bound)
        return w, b

    w1, b1 = lin(ks[0], ks[1], in_dim, n_latent1)
    w2, b2 = lin(ks[2], ks[3], n_latent1, n_latent1)
    w3, b3 = lin(ks[4], ks[5], n_latent1, n_latent1)
    w4, b4 = lin(ks[6], ks[7], 3 * n_latent1, out_dim)

    scalings = jax.random.uniform(ks[8], (1, 2), jnp.float32)          # torch.rand(1, 2)
    means = jnp.linspace(-1.0, 2.0, out_dim, dtype=jnp.float32).reshape(out_dim, 1)
    variances = jnp.linspace(0.1, 0.8, out_dim, dtype=jnp.float32).reshape(out_dim, 1)

    return dict(w1=w1, b1=b1, w2=w2, b2=b2, w3=w3, b3=b3, w4=w4, b4=b4,
                means=means, variances=variances, scalings=scalings)


def reference(x, p):
    # Pure-JAX f32 reference in the original (batch, features) PyTorch layout.
    x1 = jnp.maximum(x @ p["w1"].T + p["b1"].T, 0.0)
    x2 = jnp.maximum(x1 @ p["w2"].T + p["b2"].T, 0.0)
    x3 = jnp.maximum(x2 @ p["w3"].T + p["b3"].T, 0.0)
    x4 = jnp.concatenate([x1, x2, x3], axis=1)
    logits = x4 @ p["w4"].T + p["b4"].T
    w = jax.nn.softmax(logits, axis=1)
    mean_est = w @ p["means"]
    var_est = w @ p["variances"]
    s = p["scalings"]
    return jnp.concatenate([s[0, 0] * mean_est, jnp.exp(s[0, 1] * var_est)], axis=1)


if __name__ == "__main__":
    key = jax.random.PRNGKey(0)
    k_params, k_x1, k_x2 = jax.random.split(key, 3)

    in_dim, out_dim, n_latent1 = 1, 4, 20
    params = make_params(k_params, in_dim, out_dim, n_latent1)

    # Tolerance is loosened vs. a pure-f32 kernel: MXU operands are bf16
    # (f32 accumulation) and the softmax denominator uses the approx
    # EUP reciprocal.
    rtol = atol = 5e-2

    # Small batch (single grid step).
    x_small = jax.random.normal(k_x1, (8, in_dim), jnp.float32)
    out_small = jax.block_until_ready(net_transformer_fixed_gauss(x_small, params))
    np.testing.assert_allclose(np.asarray(out_small),
                               np.asarray(reference(x_small, params)),
                               rtol=rtol, atol=atol)

    # Ragged multi-tile batch: exercises >1 grid step and the padded tail.
    x_big = jax.random.normal(k_x2, (300, in_dim), jnp.float32)
    out_big = jax.block_until_ready(net_transformer_fixed_gauss(x_big, params))
    np.testing.assert_allclose(np.asarray(out_big),
                               np.asarray(reference(x_big, params)),
                               rtol=rtol, atol=atol)

    print("KERNEL_OK")
</pallas_src>

<mosaic_0001>
module attributes {stable_mosaic.version = 11 : i64} {
  func.func @kernel(%arg0: i32, %arg1: memref<1x128xf32, #tpu.memory_space<vmem>>, %arg2: memref<24x1xf32, #tpu.memory_space<vmem>>, %arg3: memref<24x1xf32, #tpu.memory_space<vmem>>, %arg4: memref<32x24xbf16, #tpu.memory_space<vmem>>, %arg5: memref<24x1xf32, #tpu.memory_space<vmem>>, %arg6: memref<32x24xbf16, #tpu.memory_space<vmem>>, %arg7: memref<24x1xf32, #tpu.memory_space<vmem>>, %arg8: memref<8x24xbf16, #tpu.memory_space<vmem>>, %arg9: memref<8x1xf32, #tpu.memory_space<vmem>>, %arg10: memref<8x1xf32, #tpu.memory_space<vmem>>, %arg11: memref<8x1xf32, #tpu.memory_space<vmem>>, %arg12: memref<2x128xf32, #tpu.memory_space<vmem>>) attributes {dimension_semantics = [#tpu.dimension_semantics<parallel>], iteration_bounds = array<i64: 1>, scalar_prefetch = 0 : i64, scratch_operands = 0 : i64, tpu.core_type = #tpu.core_type<tc>, window_params = [{transform_indices = @transform_0, window_bounds = array<i64: 1, 128>}, {pipeline_mode = #tpu.pipeline_mode<synchronous>, transform_indices = @transform_1, window_bounds = array<i64: 24, 1>}, {pipeline_mode = #tpu.pipeline_mode<synchronous>, transform_indices = @transform_2, window_bounds = array<i64: 24, 1>}, {pipeline_mode = #tpu.pipeline_mode<synchronous>, transform_indices = @transform_3, window_bounds = array<i64: 32, 24>}, {pipeline_mode = #tpu.pipeline_mode<synchronous>, transform_indices = @transform_4, window_bounds = array<i64: 24, 1>}, {pipeline_mode = #tpu.pipeline_mode<synchronous>, transform_indices = @transform_5, window_bounds = array<i64: 32, 24>}, {pipeline_mode = #tpu.pipeline_mode<synchronous>, transform_indices = @transform_6, window_bounds = array<i64: 24, 1>}, {pipeline_mode = #tpu.pipeline_mode<synchronous>, transform_indices = @transform_7, window_bounds = array<i64: 8, 24>}, {pipeline_mode = #tpu.pipeline_mode<synchronous>, transform_indices = @transform_8, window_bounds = array<i64: 8, 1>}, {pipeline_mode = #tpu.pipeline_mode<synchronous>, transform_indices = @transform_9, window_bounds = array<i64: 8, 1>}, {pipeline_mode = #tpu.pipeline_mode<synchronous>, transform_indices = @transform_10, window_bounds = array<i64: 8, 1>}, {transform_indices = @transform_11, window_bounds = array<i64: 2, 128>}]} {
    %c0 = arith.constant 0 : index
    %c0_0 = arith.constant 0 : index
    %0 = vector.load %arg1[%c0, %c0_0] : memref<1x128xf32, #tpu.memory_space<vmem>>, vector<1x128xf32>
    %c0_1 = arith.constant 0 : index
    %c0_2 = arith.constant 0 : index
    %1 = vector.load %arg2[%c0_1, %c0_2] : memref<24x1xf32, #tpu.memory_space<vmem>>, vector<24x1xf32>
    %2 = vector.broadcast %1 : vector<24x1xf32> to vector<24x128xf32>
    %3 = vector.broadcast %0 : vector<1x128xf32> to vector<24x128xf32>
    %4 = arith.mulf %2, %3 : vector<24x128xf32>
    %c0_3 = arith.constant 0 : index
    %c0_4 = arith.constant 0 : index
    %5 = vector.load %arg3[%c0_3, %c0_4] : memref<24x1xf32, #tpu.memory_space<vmem>>, vector<24x1xf32>
    %6 = vector.broadcast %5 : vector<24x1xf32> to vector<24x128xf32>
    %7 = arith.addf %4, %6 : vector<24x128xf32>
    %cst = arith.constant 0.000000e+00 : f32
    %8 = vector.broadcast %cst : f32 to vector<24x128xf32>
    %9 = arith.maximumf %7, %8 : vector<24x128xf32>
    %c0_5 = arith.constant 0 : index
    %c0_6 = arith.constant 0 : index
    %10 = vector.load %arg4[%c0_5, %c0_6] : memref<32x24xbf16, #tpu.memory_space<vmem>>, vector<32x24xbf16>
    %11 = arith.truncf %9 : vector<24x128xf32> to vector<24x128xbf16>
    %cst_7 = arith.constant dense<0.000000e+00> : vector<32x128xf32>
    %12 = tpu.matmul %10, %11, %cst_7 {dimension_numbers = #tpu.dot_dimension_numbers<[1], [0], [0], [1], [0, 0, 1, 1], [], []>} : vector<32x24xbf16>, vector<24x128xbf16>, vector<32x128xf32> -> vector<32x128xf32>
    %13 = vector.extract_strided_slice %12 {offsets = [0, 0], sizes = [24, 128], strides = [1, 1]} : vector<32x128xf32> to vector<24x128xf32>
    %c0_8 = arith.constant 0 : index
    %c0_9 = arith.constant 0 : index
    %14 = vector.load %arg5[%c0_8, %c0_9] : memref<24x1xf32, #tpu.memory_space<vmem>>, vector<24x1xf32>
    %15 = vector.broadcast %14 : vector<24x1xf32> to vector<24x128xf32>
    %16 = arith.addf %13, %15 : vector<24x128xf32>
    %cst_10 = arith.constant 0.000000e+00 : f32
    %17 = vector.broadcast %cst_10 : f32 to vector<24x128xf32>
    %18 = arith.maximumf %16, %17 : vector<24x128xf32>
    %19 = vector.extract_strided_slice %12 {offsets = [24, 0], sizes = [8, 128], strides = [1, 1]} : vector<32x128xf32> to vector<8x128xf32>
    %c0_11 = arith.constant 0 : index
    %c0_12 = arith.constant 0 : index
    %20 = vector.load %arg6[%c0_11, %c0_12] : memref<32x24xbf16, #tpu.memory_space<vmem>>, vector<32x24xbf16>
    %21 = arith.truncf %18 : vector<24x128xf32> to vector<24x128xbf16>
    %cst_13 = arith.constant dense<0.000000e+00> : vector<32x128xf32>
    %22 = tpu.matmul %20, %21, %cst_13 {dimension_numbers = #tpu.dot_dimension_numbers<[1], [0], [0], [1], [0, 0, 1, 1], [], []>} : vector<32x24xbf16>, vector<24x128xbf16>, vector<32x128xf32> -> vector<32x128xf32>
    %23 = vector.extract_strided_slice %22 {offsets = [0, 0], sizes = [24, 128], strides = [1, 1]} : vector<32x128xf32> to vector<24x128xf32>
    %c0_14 = arith.constant 0 : index
    %c0_15 = arith.constant 0 : index
    %24 = vector.load %arg7[%c0_14, %c0_15] : memref<24x1xf32, #tpu.memory_space<vmem>>, vector<24x1xf32>
    %25 = vector.broadcast %24 : vector<24x1xf32> to vector<24x128xf32>
    %26 = arith.addf %23, %25 : vector<24x128xf32>
    %cst_16 = arith.constant 0.000000e+00 : f32
    %27 = vector.broadcast %cst_16 : f32 to vector<24x128xf32>
    %28 = arith.maximumf %26, %27 : vector<24x128xf32>
    %29 = vector.extract_strided_slice %22 {offsets = [24, 0], sizes = [8, 128], strides = [1, 1]} : vector<32x128xf32> to vector<8x128xf32>
    %c0_17 = arith.constant 0 : index
    %c0_18 = arith.constant 0 : index
    %30 = vector.load %arg8[%c0_17, %c0_18] : memref<8x24xbf16, #tpu.memory_space<vmem>>, vector<8x24xbf16>
    %31 = arith.truncf %28 : vector<24x128xf32> to vector<24x128xbf16>
    %cst_19 = arith.constant dense<0.000000e+00> : vector<8x128xf32>
    %32 = tpu.matmul %30, %31, %cst_19 {dimension_numbers = #tpu.dot_dimension_numbers<[1], [0], [0], [1], [0, 0, 1, 1], [], []>} : vector<8x24xbf16>, vector<24x128xbf16>, vector<8x128xf32> -> vector<8x128xf32>
    %33 = arith.addf %19, %29 : vector<8x128xf32>
    %34 = arith.addf %33, %32 : vector<8x128xf32>
    %c0_20 = arith.constant 0 : index
    %c0_21 = arith.constant 0 : index
    %35 = vector.load %arg9[%c0_20, %c0_21] : memref<8x1xf32, #tpu.memory_space<vmem>>, vector<8x1xf32>
    %36 = vector.broadcast %35 : vector<8x1xf32> to vector<8x128xf32>
    %37 = arith.addf %34, %36 : vector<8x128xf32>
    %cst_22 = arith.constant dense<0xFF800000> : vector<128xf32>
    %38 = vector.multi_reduction <maximumf>, %37, %cst_22 [0] : vector<8x128xf32> to vector<128xf32>
    %39 = vector.shape_cast %38 : vector<128xf32> to vector<1x128xf32>
    %40 = vector.broadcast %39 : vector<1x128xf32> to vector<8x128xf32>
    %41 = arith.subf %37, %40 : vector<8x128xf32>
    %42 = math.exp %41 : vector<8x128xf32>
    %cst_23 = arith.constant dense<0.000000e+00> : vector<128xf32>
    %43 = vector.multi_reduction <add>, %42, %cst_23 [0] : vector<8x128xf32> to vector<128xf32>
    %44 = vector.shape_cast %43 : vector<128xf32> to vector<1x128xf32>
    %45 = tpu.reciprocal %44 {approx = true} : vector<1x128xf32> -> vector<1x128xf32>
    %c0_24 = arith.constant 0 : index
    %c0_25 = arith.constant 0 : index
    %46 = vector.load %arg10[%c0_24, %c0_25] : memref<8x1xf32, #tpu.memory_space<vmem>>, vector<8x1xf32>
    %47 = vector.broadcast %46 : vector<8x1xf32> to vector<8x128xf32>
    %48 = arith.mulf %42, %47 : vector<8x128xf32>
    %cst_26 = arith.constant dense<0.000000e+00> : vector<128xf32>
    %49 = vector.multi_reduction <add>, %48, %cst_26 [0] : vector<8x128xf32> to vector<128xf32>
    %50 = vector.shape_cast %49 : vector<128xf32> to vector<1x128xf32>
    %51 = arith.mulf %50, %45 : vector<1x128xf32>
    %c0_27 = arith.constant 0 : index
    %c0_28 = arith.constant 0 : index
    %52 = vector.load %arg11[%c0_27, %c0_28] : memref<8x1xf32, #tpu.memory_space<vmem>>, vector<8x1xf32>
    %53 = vector.broadcast %52 : vector<8x1xf32> to vector<8x128xf32>
    %54 = arith.mulf %42, %53 : vector<8x128xf32>
    %cst_29 = arith.constant dense<0.000000e+00> : vector<128xf32>
    %55 = vector.multi_reduction <add>, %54, %cst_29 [0] : vector<8x128xf32> to vector<128xf32>
    %56 = vector.shape_cast %55 : vector<128xf32> to vector<1x128xf32>
    %57 = arith.mulf %56, %45 : vector<1x128xf32>
    %c0_30 = arith.constant 0 : index
    %c0_31 = arith.constant 0 : index
    %58 = vector.load %arg12[%c0_30, %c0_31] : memref<2x128xf32, #tpu.memory_space<vmem>>, vector<1x128xf32>
    tpu.vector_store %arg12[%c0_30, %c0_31], %51 {strides = array<i32>} : memref<2x128xf32, #tpu.memory_space<vmem>>, vector<1x128xf32>,
    %59 = math.exp %57 : vector<1x128xf32>
    %c1 = arith.constant 1 : index
    %c0_32 = arith.constant 0 : index
    %60 = vector.load %arg12[%c1, %c0_32] : memref<2x128xf32, #tpu.memory_space<vmem>>, vector<1x128xf32>
    tpu.vector_store %arg12[%c1, %c0_32], %59 {strides = array<i32>} : memref<2x128xf32, #tpu.memory_space<vmem>>, vector<1x128xf32>,
    return
  }
  func.func @transform_0(%arg0: i32) -> (i32, i32) {
    %c0_i32 = arith.constant 0 : i32
    %c0_i32_0 = arith.constant 0 : i32
    return %c0_i32, %arg0 : i32, i32
  }
  func.func @transform_1(%arg0: i32) -> (i32, i32) {
    %c0_i32 = arith.constant 0 : i32
    %c0_i32_0 = arith.constant 0 : i32
    %c0_i32_1 = arith.constant 0 : i32
    return %c0_i32, %c0_i32_0 : i32, i32
  }
  func.func @transform_2(%arg0: i32) -> (i32, i32) {
    %c0_i32 = arith.constant 0 : i32
    %c0_i32_0 = arith.constant 0 : i32
    %c0_i32_1 = arith.constant 0 : i32
    return %c0_i32, %c0_i32_0 : i32, i32
  }
  func.func @transform_3(%arg0: i32) -> (i32, i32) {
    %c0_i32 = arith.constant 0 : i32
    %c0_i32_0 = arith.constant 0 : i32
    %c0_i32_1 = arith.constant 0 : i32
    return %c0_i32, %c0_i32_0 : i32, i32
  }
  func.func @transform_4(%arg0: i32) -> (i32, i32) {
    %c0_i32 = arith.constant 0 : i32
    %c0_i32_0 = arith.constant 0 : i32
    %c0_i32_1 = arith.constant 0 : i32
    return %c0_i32, %c0_i32_0 : i32, i32
  }
  func.func @transform_5(%arg0: i32) -> (i32, i32) {
    %c0_i32 = arith.constant 0 : i32
    %c0_i32_0 = arith.constant 0 : i32
    %c0_i32_1 = arith.constant 0 : i32
    return %c0_i32, %c0_i32_0 : i32, i32
  }
  func.func @transform_6(%arg0: i32) -> (i32, i32) {
    %c0_i32 = arith.constant 0 : i32
    %c0_i32_0 = arith.constant 0 : i32
    %c0_i32_1 = arith.constant 0 : i32
    return %c0_i32, %c0_i32_0 : i32, i32
  }
  func.func @transform_7(%arg0: i32) -> (i32, i32) {
    %c0_i32 = arith.constant 0 : i32
    %c0_i32_0 = arith.constant 0 : i32
    %c0_i32_1 = arith.constant 0 : i32
    return %c0_i32, %c0_i32_0 : i32, i32
  }
  func.func @transform_8(%arg0: i32) -> (i32, i32) {
    %c0_i32 = arith.constant 0 : i32
    %c0_i32_0 = arith.constant 0 : i32
    %c0_i32_1 = arith.constant 0 : i32
    return %c0_i32, %c0_i32_0 : i32, i32
  }
  func.func @transform_9(%arg0: i32) -> (i32, i32) {
    %c0_i32 = arith.constant 0 : i32
    %c0_i32_0 = arith.constant 0 : i32
    %c0_i32_1 = arith.constant 0 : i32
    return %c0_i32, %c0_i32_0 : i32, i32
  }
  func.func @transform_10(%arg0: i32) -> (i32, i32) {
    %c0_i32 = arith.constant 0 : i32
    %c0_i32_0 = arith.constant 0 : i32
    %c0_i32_1 = arith.constant 0 : i32
    return %c0_i32, %c0_i32_0 : i32, i32
  }
  func.func @transform_11(%arg0: i32) -> (i32, i32) {
    %c0_i32 = arith.constant 0 : i32
    %c0_i32_0 = arith.constant 0 : i32
    return %c0_i32, %arg0 : i32, i32
  }
}

</mosaic_0001>

<llo_original>
// kernel: tpu_custom_call.1
$region0: #{tpu_custom_call.1}
  #allocation0 [shape = 'u32[]', space=smem, size = 0x4, offset = 0x4, fixed_abs, tag = 'smem constant byte address 0x4 - core index']
  #allocation1 [shape = 'u32[144,128]{1,0:T(1,128)}', space=vmem, size = 0x12000, scoped, tag = 'internal scratch']
  %s0 = inlined_call_operand.vmem [shape: f32[1,128], index: 0, kind: input, shape index: {}]
  %s1 = inlined_call_operand.vmem [shape: f32[24,1], index: 1, kind: input, shape index: {}]
  %s2 = inlined_call_operand.vmem [shape: f32[24,1], index: 2, kind: input, shape index: {}]
  %s3 = inlined_call_operand.vmem [shape: bf16[32,24], index: 3, kind: input, shape index: {}]
  %s4 = inlined_call_operand.vmem [shape: f32[24,1], index: 4, kind: input, shape index: {}]
  %s5 = inlined_call_operand.vmem [shape: bf16[32,24], index: 5, kind: input, shape index: {}]
  %s6 = inlined_call_operand.vmem [shape: f32[24,1], index: 6, kind: input, shape index: {}]
  %s7 = inlined_call_operand.vmem [shape: bf16[8,24], index: 7, kind: input, shape index: {}]
  %s8 = inlined_call_operand.vmem [shape: f32[8,1], index: 8, kind: input, shape index: {}]
  %s9 = inlined_call_operand.vmem [shape: f32[8,1], index: 9, kind: input, shape index: {}]
  %s10 = inlined_call_operand.vmem [shape: f32[8,1], index: 10, kind: input, shape index: {}]
  %s11 = inlined_call_operand.hbm [shape: f32[2,128], index: 11, kind: output, shape index: {}]
  %s12 = sld [smem:[#allocation0]]
  $region54: #{tpu_custom_call.1} parent=0
    _
  %s14 = ssub.s32 1, %s12
  %s15 = scalar_select 0, %s14, %s12
  $region1: #{tpu_custom_call.1} parent=0
    #allocation2 [shape = 'u8[1024]{0}', space=vmem, size = 0x400, scoped, tag = 'output window, operand 0, single buffered']
    #allocation3 [shape = 's32[1]{0}', space=sflag, size = 0x4, scoped, tag = 'scoped memory for tpu_custom_call.1']
    %16 = vsyncpa [#allocation3], 0
    // Predicated region
    $region2: #{tpu_custom_call.1} parent=1 // pred_check
      _
    $region3: #{tpu_custom_call.1} parent=1 // pred_check_branch
      %18 = sbr.rel (0) target = $region5
    $region4: #{tpu_custom_call.1} parent=1 // pred_region
      _
    $region5: #{tpu_custom_call.1} parent=1 // pred_fallthru
      _
    // Predicated region
    $region6: #{tpu_custom_call.1} parent=1 // pred_check
      _
    $region7: #{tpu_custom_call.1} parent=1 // pred_check_branch
      %20 = sbr.rel (0) target = $region9
    $region8: #{tpu_custom_call.1} parent=1 // pred_region
      _
    $region9: #{tpu_custom_call.1} parent=1 // pred_fallthru
      _
    // Predicated region
    $region10: #{tpu_custom_call.1} parent=1 // pred_check
      _
    $region11: #{tpu_custom_call.1} parent=1 // pred_check_branch
      %22 = sbr.rel (0) target = $region13
    $region12: #{tpu_custom_call.1} parent=1 // pred_region
      _
    $region13: #{tpu_custom_call.1} parent=1 // pred_fallthru
      _
    // Predicated region
    $region14: #{tpu_custom_call.1} parent=1 // pred_check
      _
    $region15: #{tpu_custom_call.1} parent=1 // pred_check_branch
      %24 = sbr.rel (0) target = $region17
    $region16: #{tpu_custom_call.1} parent=1 // pred_region
      _
    $region17: #{tpu_custom_call.1} parent=1 // pred_fallthru
      _
    // Predicated region
    $region18: #{tpu_custom_call.1} parent=1 // pred_check
      _
    $region19: #{tpu_custom_call.1} parent=1 // pred_check_branch
      %26 = sbr.rel (0) target = $region21
    $region20: #{tpu_custom_call.1} parent=1 // pred_region
      _
    $region21: #{tpu_custom_call.1} parent=1 // pred_fallthru
      _
    // Predicated region
    $region22: #{tpu_custom_call.1} parent=1 // pred_check
      _
    $region23: #{tpu_custom_call.1} parent=1 // pred_check_branch
      %28 = sbr.rel (0) target = $region25
    $region24: #{tpu_custom_call.1} parent=1 // pred_region
      _
    $region25: #{tpu_custom_call.1} parent=1 // pred_fallthru
      _
    // Predicated region
    $region26: #{tpu_custom_call.1} parent=1 // pred_check
      _
    $region27: #{tpu_custom_call.1} parent=1 // pred_check_branch
      %30 = sbr.rel (0) target = $region29
    $region28: #{tpu_custom_call.1} parent=1 // pred_region
      _
    $region29: #{tpu_custom_call.1} parent=1 // pred_fallthru
      _
    // Predicated region
    $region30: #{tpu_custom_call.1} parent=1 // pred_check
      _
    $region31: #{tpu_custom_call.1} parent=1 // pred_check_branch
      %32 = sbr.rel (0) target = $region33
    $region32: #{tpu_custom_call.1} parent=1 // pred_region
      _
    $region33: #{tpu_custom_call.1} parent=1 // pred_fallthru
      _
    // Predicated region
    $region34: #{tpu_custom_call.1} parent=1 // pred_check
      _
    $region35: #{tpu_custom_call.1} parent=1 // pred_check_branch
      %34 = sbr.rel (0) target = $region37
    $region36: #{tpu_custom_call.1} parent=1 // pred_region
      _
    $region37: #{tpu_custom_call.1} parent=1 // pred_fallthru
      _
    // Predicated region
    $region38: #{tpu_custom_call.1} parent=1 // pred_check
      _
    $region39: #{tpu_custom_call.1} parent=1 // pred_check_branch
      %36 = sbr.rel (0) target = $region41
    $region40: #{tpu_custom_call.1} parent=1 // pred_region
      _
    $region41: #{tpu_custom_call.1} parent=1 // pred_fallthru
      _
    // Predicated region
    $region42: #{tpu_custom_call.1} parent=1 // pred_check
      _
    $region43: #{tpu_custom_call.1} parent=1 // pred_check_branch
      %38 = sbr.rel (0) target = $region45
    $region44: #{tpu_custom_call.1} parent=1 // pred_region
      _
    $region45: #{tpu_custom_call.1} parent=1 // pred_fallthru
      _
    %v40 = vld [vmem:[%s0] sm:$0x1]
    %v41 = vld [vmem:[%s1] sm:$0xff]
    %v42 = vld [vmem:[%s1 + $0x8] sm:$0xff]
    %v43 = vld [vmem:[%s1 + $0x10] sm:$0xff]
    %45 = vset.pattern.permute.xlu0 0
    %46 = vperm.xlu0 %45, %v41
    %v47 = vpop.permute.xlu0 %46
    %50 = vset.pattern.permute.xlu0 0
    %51 = vperm.xlu0 %50, %v42
    %v52 = vpop.permute.xlu0 %51
    %55 = vset.pattern.permute.xlu0 0
    %56 = vperm.xlu0 %55, %v43
    %v57 = vpop.permute.xlu0 %56
    %v60 = vlaneseq
    %v61 = vshrl.u32 %v60, 7
    %v62 = vsub.s32 0, %v61
    %v63 = vrot.slane %v40, %v62
    %v65 = vmul.f32 %v47, %v63
    %v66 = vmul.f32 %v52, %v63
    %v67 = vmul.f32 %v57, %v63
    %v68 = vld [vmem:[%s2] sm:$0xff]
    %v69 = vld [vmem:[%s2 + $0x8] sm:$0xff]
    %v70 = vld [vmem:[%s2 + $0x10] sm:$0xff]
    %72 = vset.pattern.permute.xlu0 0
    %73 = vperm.xlu0 %72, %v68
    %v74 = vpop.permute.xlu0 %73
    %77 = vset.pattern.permute.xlu0 0
    %78 = vperm.xlu0 %77, %v69
    %v79 = vpop.permute.xlu0 %78
    %82 = vset.pattern.permute.xlu0 0
    %83 = vperm.xlu0 %82, %v70
    %v84 = vpop.permute.xlu0 %83
    %v86 = vadd.f32 %v65, %v74
    %v87 = vadd.f32 %v66, %v79
    %v88 = vadd.f32 %v67, %v84
    %v89 = vmax.f32 %v86, 0.0
    %v90 = vmax.f32 %v87, 0.0
    %v91 = vmax.f32 %v88, 0.0
    %v92 = vld [vmem:[%s3] sm:$0xf]
    %v93 = vld [vmem:[%s3 + $0x4] sm:$0xf]
    %v94 = vld [vmem:[%s3 + $0x8] sm:$0xf]
    %v95 = vld [vmem:[%s3 + $0xc] sm:$0xf]
    %v96 = vpack.c.bf16 %v90, %v89
    %v97 = vpack.c.bf16 %v91, %v91
    %v102 = vunpack.c.l.b16 %v92
    %v103 = vunpack.c.l.b16 %v93
    %v104 = vunpack.c.l.b16 %v94
    %v105 = vunpack.c.l.b16 %v95
    %v106 = vpack.c.b16 %v103, %v102
    %v107 = vpack.c.b16 %v105, %v104
    %vm108 = vcmask 195584
    %v110 = vsel %vm108, %v106, 0
    %v113 = vsel %vm108, %v107, 0
    %vm115 = vcmask 1043456
    %v117 = vsel %vm115, %v97, 0
    %119 = vmatprep.subr.bf16.mxu0 0
    %120 = vmatpush1.bf16.msra.mxu0 %v96
    %121 = vmatprep.subr.bf16.mxu0 0
    %122 = vmatpush1.bf16.msra.mxu0 %v117
    %123 = vmatprep.subr.bf16.mxu0 0
    %124 = vmatpush1.bf16.msra.mxu0 0
    %125 = vmatprep.subr.bf16.mxu0 0
    %126 = vmatpush1.bf16.msra.mxu0 0
    %127 = vmatprep.subr.bf16.mxu0 0
    %128 = vmatpush1.bf16.msra.mxu0 0
    %129 = vmatprep.subr.bf16.mxu0 0
    %130 = vmatpush1.bf16.msra.mxu0 0
    %131 = vmatprep.subr.bf16.mxu0 0
    %132 = vmatpush1.bf16.msra.mxu0 0
    %133 = vmatprep.subr.bf16.mxu0 0
    %134 = vmatpush1.bf16.msra.mxu0 0
    %135 = vmatprep.subr.bf16.mxu0 0
    %136 = vmatpush1.bf16.msra.mxu0 0
    %137 = vmatprep.subr.bf16.mxu0 0
    %138 = vmatpush1.bf16.msra.mxu0 0
    %139 = vmatprep.subr.bf16.mxu0 0
    %140 = vmatpush1.bf16.msra.mxu0 0
    %141 = vmatprep.subr.bf16.mxu0 0
    %142 = vmatpush1.bf16.msra.mxu0 0
    %143 = vmatprep.subr.bf16.mxu0 0
    %144 = vmatpush1.bf16.msra.mxu0 0
    %145 = vmatprep.subr.bf16.mxu0 0
    %146 = vmatpush1.bf16.msra.mxu0 0
    %147 = vmatprep.subr.bf16.mxu0 0
    %148 = vmatpush1.bf16.msra.mxu0 0
    %149 = vmatprep.subr.bf16.mxu0 0
    %150 = vmatpush1.bf16.msra.mxu0 0
    %151 = vmatprep.mubr.bf16.mxu0 0
    %152 = vmatmul.mubr.bf16.gmra.mrb[0].mxu0 %v110
    %v153 = vpop.f32.mrb[0].mxu0
    %v154 = vadd.f32 0.0, %v153
    %v155 = vpop.f32.mrb[0].mxu0
    %v156 = vpop.f32.mrb[0].mxu0
    %v157 = vadd.f32 0.0, %v156
    %v158 = vpop.f32.mrb[0].mxu0
    %159 = vmatprep.mubr.bf16.mxu0 0
    %160 = vmatmul.mubr.bf16.gmra.mrb[0].mxu0 %v113
    %v161 = vpop.f32.mrb[0].mxu0
    %v162 = vadd.f32 0.0, %v161
    %v163 = vpop.f32.mrb[0].mxu0
    %v164 = vpop.f32.mrb[0].mxu0
    %v165 = vadd.f32 0.0, %v164
    %v166 = vpop.f32.mrb[0].mxu0
    %167 = vdwg.mxu0
    %v168 = vld [vmem:[%s4] sm:$0xff]
    %v169 = vld [vmem:[%s4 + $0x8] sm:$0xff]
    %v170 = vld [vmem:[%s4 + $0x10] sm:$0xff]
    %172 = vset.pattern.permute.xlu0 0
    %173 = vperm.xlu0 %172, %v168
    %v174 = vpop.permute.xlu0 %173
    %177 = vset.pattern.permute.xlu0 0
    %178 = vperm.xlu0 %177, %v169
    %v179 = vpop.permute.xlu0 %178
    %182 = vset.pattern.permute.xlu0 0
    %183 = vperm.xlu0 %182, %v170
    %v184 = vpop.permute.xlu0 %183
    %v186 = vadd.f32 %v154, %v174
    %v187 = vadd.f32 %v157, %v179
    %v188 = vadd.f32 %v162, %v184
    %v189 = vmax.f32 %v186, 0.0
    %v190 = vmax.f32 %v187, 0.0
    %v191 = vmax.f32 %v188, 0.0
    %v192 = vld [vmem:[%s5] sm:$0xf]
    %v193 = vld [vmem:[%s5 + $0x4] sm:$0xf]
    %v194 = vld [vmem:[%s5 + $0x8] sm:$0xf]
    %v195 = vld [vmem:[%s5 + $0xc] sm:$0xf]
    %v196 = vpack.c.bf16 %v190, %v189
    %v197 = vpack.c.bf16 %v191, %v191
    %v202 = vunpack.c.l.b16 %v192
    %v203 = vunpack.c.l.b16 %v193
    %v204 = vunpack.c.l.b16 %v194
    %v205 = vunpack.c.l.b16 %v195
    %v206 = vpack.c.b16 %v203, %v202
    %v207 = vpack.c.b16 %v205, %v204
    %v209 = vsel %vm108, %v206, 0
    %v212 = vsel %vm108, %v207, 0
    %v215 = vsel %vm115, %v197, 0
    %217 = vmatprep.subr.bf16.mxu0 0
    %218 = vmatpush1.bf16.msra.mxu0 %v196
    %219 = vmatprep.subr.bf16.mxu0 0
    %220 = vmatpush1.bf16.msra.mxu0 %v215
    %221 = vmatprep.subr.bf16.mxu0 0
    %222 = vmatpush1.bf16.msra.mxu0 0
    %223 = vmatprep.subr.bf16.mxu0 0
    %224 = vmatpush1.bf16.msra.mxu0 0
    %225 = vmatprep.subr.bf16.mxu0 0
    %226 = vmatpush1.bf16.msra.mxu0 0
    %227 = vmatprep.subr.bf16.mxu0 0
    %228 = vmatpush1.bf16.msra.mxu0 0
    %229 = vmatprep.subr.bf16.mxu0 0
    %230 = vmatpush1.bf16.msra.mxu0 0
    %231 = vmatprep.subr.bf16.mxu0 0
    %232 = vmatpush1.bf16.msra.mxu0 0
    %233 = vmatprep.subr.bf16.mxu0 0
    %234 = vmatpush1.bf16.msra.mxu0 0
    %235 = vmatprep.subr.bf16.mxu0 0
    %236 = vmatpush1.bf16.msra.mxu0 0
    %237 = vmatprep.subr.bf16.mxu0 0
    %238 = vmatpush1.bf16.msra.mxu0 0
    %239 = vmatprep.subr.bf16.mxu0 0
    %240 = vmatpush1.bf16.msra.mxu0 0
    %241 = vmatprep.subr.bf16.mxu0 0
    %242 = vmatpush1.bf16.msra.mxu0 0
    %243 = vmatprep.subr.bf16.mxu0 0
    %244 = vmatpush1.bf16.msra.mxu0 0
    %245 = vmatprep.subr.bf16.mxu0 0
    %246 = vmatpush1.bf16.msra.mxu0 0
    %247 = vmatprep.subr.bf16.mxu0 0
    %248 = vmatpush1.bf16.msra.mxu0 0
    %249 = vmatprep.mubr.bf16.mxu0 0
    %250 = vmatmul.mubr.bf16.gmra.mrb[0].mxu0 %v209
    %v251 = vpop.f32.mrb[0].mxu0
    %v252 = vadd.f32 0.0, %v251
    %v253 = vpop.f32.mrb[0].mxu0
    %v254 = vpop.f32.mrb[0].mxu0
    %v255 = vadd.f32 0.0, %v254
    %v256 = vpop.f32.mrb[0].mxu0
    %257 = vmatprep.mubr.bf16.mxu0 0
    %258 = vmatmul.mubr.bf16.gmra.mrb[0].mxu0 %v212
    %v259 = vpop.f32.mrb[0].mxu0
    %v260 = vadd.f32 0.0, %v259
    %v261 = vpop.f32.mrb[0].mxu0
    %v262 = vpop.f32.mrb[0].mxu0
    %v263 = vadd.f32 0.0, %v262
    %v264 = vpop.f32.mrb[0].mxu0
    %265 = vdwg.mxu0
    %v266 = vld [vmem:[%s6] sm:$0xff]
    %v267 = vld [vmem:[%s6 + $0x8] sm:$0xff]
    %v268 = vld [vmem:[%s6 + $0x10] sm:$0xff]
    %270 = vset.pattern.permute.xlu0 0
    %271 = vperm.xlu0 %270, %v266
    %v272 = vpop.permute.xlu0 %271
    %275 = vset.pattern.permute.xlu0 0
    %276 = vperm.xlu0 %275, %v267
    %v277 = vpop.permute.xlu0 %276
    %280 = vset.pattern.permute.xlu0 0
    %281 = vperm.xlu0 %280, %v268
    %v282 = vpop.permute.xlu0 %281
    %v284 = vadd.f32 %v252, %v272
    %v285 = vadd.f32 %v255, %v277
    %v286 = vadd.f32 %v260, %v282
    %v287 = vmax.f32 %v284, 0.0
    %v288 = vmax.f32 %v285, 0.0
    %v289 = vmax.f32 %v286, 0.0
    %v290 = vld [vmem:[%s7] sm:$0xf]
    %v291 = vpack.c.bf16 %v288, %v287
    %v292 = vpack.c.bf16 %v289, %v289
    %v294 = vsel %vm108, %v290, 0
    %v297 = vsel %vm115, %v292, 0
    %299 = vmatprep.subr.bf16.mxu0 0
    %300 = vmatpush1.bf16.msra.mxu0 %v291
    %301 = vmatprep.subr.bf16.mxu0 0
    %302 = vmatpush1.bf16.msra.mxu0 %v297
    %303 = vmatprep.subr.bf16.mxu0 0
    %304 = vmatpush1.bf16.msra.mxu0 0
    %305 = vmatprep.subr.bf16.mxu0 0
    %306 = vmatpush1.bf16.msra.mxu0 0
    %307 = vmatprep.subr.bf16.mxu0 0
    %308 = vmatpush1.bf16.msra.mxu0 0
    %309 = vmatprep.subr.bf16.mxu0 0
    %310 = vmatpush1.bf16.msra.mxu0 0
    %311 = vmatprep.subr.bf16.mxu0 0
    %312 = vmatpush1.bf16.msra.mxu0 0
    %313 = vmatprep.subr.bf16.mxu0 0
    %314 = vmatpush1.bf16.msra.mxu0 0
    %315 = vmatprep.subr.bf16.mxu0 0
    %316 = vmatpush1.bf16.msra.mxu0 0
    %317 = vmatprep.subr.bf16.mxu0 0
    %318 = vmatpush1.bf16.msra.mxu0 0
    %319 = vmatprep.subr.bf16.mxu0 0
    %320 = vmatpush1.bf16.msra.mxu0 0
    %321 = vmatprep.subr.bf16.mxu0 0
    %322 = vmatpush1.bf16.msra.mxu0 0
    %323 = vmatprep.subr.bf16.mxu0 0
    %324 = vmatpush1.bf16.msra.mxu0 0
    %325 = vmatprep.subr.bf16.mxu0 0
    %326 = vmatpush1.bf16.msra.mxu0 0
    %327 = vmatprep.subr.bf16.mxu0 0
    %328 = vmatpush1.bf16.msra.mxu0 0
    %329 = vmatprep.subr.bf16.mxu0 0
    %330 = vmatpush1.bf16.msra.mxu0 0
    %331 = vmatprep.mubr.bf16.mxu0 0
    %332 = vmatmul.mubr.bf16.gmra.mrb[0].mxu0 %v294
    %v333 = vpop.f32.mrb[0].mxu0
    %v334 = vadd.f32 0.0, %v333
    %v335 = vpop.f32.mrb[0].mxu0
    %v336 = vpop.f32.mrb[0].mxu0
    %v337 = vpop.f32.mrb[0].mxu0
    %338 = vdwg.mxu0
    %v339 = vadd.f32 %v165, %v263
    %v340 = vadd.f32 %v339, %v334
    %v341 = vld [vmem:[%s8] sm:$0xff]
    %343 = vset.pattern.permute.xlu0 0
    %344 = vperm.xlu0 %343, %v341
    %v345 = vpop.permute.xlu0 %344
    %v347 = vadd.f32 %v340, %v345
    %v348 = vrot.slane %v347, 4
    %v349 = vmax.f32 %v347, %v348
    %v350 = vrot.slane %v349, 2
    %v351 = vmax.f32 %v349, %v350
    %v352 = vrot.slane %v351, 1
    %v353 = vmax.f32 %v351, %v352
    %v354 = vsub.f32 %v347, %v353
    %v355 = vmul.f32 %v354, 1.442695
    %v356 = vpow.pop %v355
    %v357 = vrot.slane %v356, 4
    %v358 = vadd.f32 %v356, %v357
    %v359 = vrot.slane %v358, 2
    %v360 = vadd.f32 %v358, %v359
    %v361 = vrot.slane %v360, 1
    %v362 = vadd.f32 %v360, %v361
    %v363 = vrcp.pop %v362
    %v364 = vld [vmem:[%s9] sm:$0xff]
    %366 = vset.pattern.permute.xlu0 0
    %367 = vperm.xlu0 %366, %v364
    %v368 = vpop.permute.xlu0 %367
    %v370 = vmul.f32 %v356, %v368
    %v371 = vrot.slane %v370, 4
    %v372 = vadd.f32 %v370, %v371
    %v373 = vrot.slane %v372, 2
    %v374 = vadd.f32 %v372, %v373
    %v375 = vrot.slane %v374, 1
    %v376 = vadd.f32 %v374, %v375
    %v377 = vmul.f32 %v376, %v363
    %v378 = vld [vmem:[%s10] sm:$0xff]
    %380 = vset.pattern.permute.xlu0 0
    %381 = vperm.xlu0 %380, %v378
    %v382 = vpop.permute.xlu0 %381
    %v384 = vmul.f32 %v356, %v382
    %v385 = vrot.slane %v384, 4
    %v386 = vadd.f32 %v384, %v385
    %v387 = vrot.slane %v386, 2
    %v388 = vadd.f32 %v386, %v387
    %v389 = vrot.slane %v388, 1
    %v390 = vadd.f32 %v388, %v389
    %v391 = vmul.f32 %v390, %v363
    %392 = vst [vmem:[#allocation2] sm:$0x1] %v377
    %v393 = vmul.f32 %v391, 1.442695
    %v394 = vpow.pop %v393
    %395 = vst [vmem:[#allocation2 + $0x1] sm:$0x1] %v394
    // Predicated region
    $region46: #{tpu_custom_call.1} parent=1 // pred_check
      _
    $region47: #{tpu_custom_call.1} parent=1 // pred_check_branch
      %397 = sbr.rel (0) target = $region49
    $region48: #{tpu_custom_call.1} parent=1 // pred_region
      %s399 = ssub.s32 32, 32
      %400 = vsyncadd [#allocation3], %s399
      %s402 = sshll.u32 [#allocation2], 4
      %s403 = int_to_ptr.vmem [resolvable:$true] %s402
      %405 = dma.vmem_to_hbm [thread:$0]  %s403, 32, %s11, [#allocation3]
    $region49: #{tpu_custom_call.1} parent=1 // pred_fallthru
      _
    // Predicated region
    $region50: #{tpu_custom_call.1} parent=1 // pred_check
      _
    $region51: #{tpu_custom_call.1} parent=1 // pred_check_branch
      %407 = sbr.rel (0) target = $region53
    $region52: #{tpu_custom_call.1} parent=1 // pred_region
      %408 = dma.done [#allocation3], 32
    $region53: #{tpu_custom_call.1} parent=1 // pred_fallthru
      _
    %409 = vsyncpa [#allocation3], 1

</llo_original>
